<compile_context>
chip_gen: v7x
topology: tpu7x:2x2x1
jax: 0.10.0
libtpu: 0.0.40
codegen_flags: <defaults>
</compile_context>

<pallas_src>
import jax
import jax.numpy as jnp
from jax.experimental import pallas as pl
from jax.experimental.pallas import tpu as pltpu


def _ceil_div(a, b):
    return -(-a // b)


def _round_up(a, b):
    return _ceil_div(a, b) * b


def _pool_out_size(size, k, s):
    """PyTorch MaxPool2d output size: ceil_mode=True, padding=0, dilation=1.

    PyTorch drops the last window if it would start outside the input
    ((out-1)*s >= size); kept for exact parity.
    """
    out = _ceil_div(size - k, s) + 1
    if (out - 1) * s >= size:
        out -= 1
    return out


def _window_lane_lists(H, W, k, stride, OH, OW):
    """Static (trace-time) lane indices of every (clipped) pooling window in the
    flattened H*W lane axis, output-pixel major."""
    wins = []
    for i in range(OH):
        for j in range(OW):
            h0, w0 = i * stride, j * stride
            lanes = tuple(
                h * W + w
                for h in range(h0, min(h0 + k, H))
                for w in range(w0, min(w0 + k, W))
            )
            wins.append(lanes)
    return tuple(wins)


def _make_pool_kernel(window_lanes):
    """Kernel over the natural layout: x_ref (TB, H*W), o_ref (TB, OH*OW)."""

    def kernel(x_ref, o_ref):
        x = x_ref[...]                              # single full-tile load
        cols = []
        for lanes in window_lanes:                  # static unroll over output px
            vals = [x[:, l:l + 1] for l in lanes]   # static lane slices
            while len(vals) > 1:                    # pairwise tree max (depth ~log2(k*k))
                nxt = [jnp.maximum(vals[i], vals[i + 1])
                       for i in range(0, len(vals) - 1, 2)]
                if len(vals) % 2:
                    nxt.append(vals[-1])
                vals = nxt
            cols.append(vals[0])
        out = cols[0] if len(cols) == 1 else jnp.concatenate(cols, axis=1)
        o_ref[...] = out

    return kernel


def _choose_sublane_tile(b, hw, p, itemsize):
    """Pick the sublane tile TB over the pooling-independent B = N*C axis."""
    if b < 256:
        return b                                    # single full-extent block
    lanes_in = _round_up(hw, 128)                   # VMEM tiles are lane-padded
    lanes_out = _round_up(p, 128)
    # Budget for the double-buffered input+output blocks; safe on v5e's 16 MiB
    # default scoped VMEM and v7x's 64 MiB physical VMEM.
    budget = 8 * 1024 * 1024
    tb = budget // (2 * (lanes_in + lanes_out) * itemsize)
    tb = max(256, min(8192, tb))
    tb = min(tb, _ceil_div(b, 2))                   # >= 2 blocks -> both TCs on v7x
    return _round_up(tb, 8)                         # sublane multiple; grid uses cdiv


def maxpool2d_ceil(x, kernel_size=3, stride=None):
    """Equivalent of nn.MaxPool2d(kernel_size, ceil_mode=True) on NCHW input."""
    if stride is None:
        stride = kernel_size
    N, C, H, W = x.shape
    k = kernel_size
    OH = _pool_out_size(H, k, stride)
    OW = _pool_out_size(W, k, stride)
    B, HW, P = N * C, H * W, OH * OW
    itemsize = jnp.dtype(x.dtype).itemsize

    windows = _window_lane_lists(H, W, k, stride, OH, OW)
    # TODO(synk): for large H*W this fully unrolls OH*OW*k*k lane slices; a
    # rolled / spatially-blocked formulation would be needed in that regime.

    TB = _choose_sublane_tile(B, HW, P, itemsize)
    grid = (pl.cdiv(B, TB),)

    # VMEM footprint of the actual (lane-padded) double-buffered in+out blocks.
    block_bytes = (2 * _round_up(TB, 8)
                   * (_round_up(HW, 128) + _round_up(P, 128)) * itemsize)
    vmem_limit = int(min(64 * 1024 * 1024, max(4 * 1024 * 1024, 2 * block_bytes)))

    x2 = x.reshape(B, HW)                           # contiguous: free reshape
    out2 = pl.pallas_call(
        _make_pool_kernel(windows),
        out_shape=jax.ShapeDtypeStruct((B, P), x.dtype),
        grid_spec=pltpu.PrefetchScalarGridSpec(
            num_scalar_prefetch=0,
            grid=grid,
            in_specs=[pl.BlockSpec((TB, HW), lambda i: (i, 0))],
            out_specs=pl.BlockSpec((TB, P), lambda i: (i, 0)),
        ),
        compiler_params=pltpu.CompilerParams(
            dimension_semantics=("parallel",),
            vmem_limit_bytes=vmem_limit,
        ),
        cost_estimate=pl.CostEstimate(
            flops=sum(len(w) - 1 for w in windows) * B,
            transcendentals=0,
            bytes_accessed=(HW + P) * B * itemsize,
        ),
    )(x2)
    return out2.reshape(N, C, OH, OW)               # contiguous: free reshape


def _reference_maxpool2d_ceil(x, kernel_size=3, stride=None):
    """Pure-JAX reference (clipped ceil_mode windows)."""
    if stride is None:
        stride = kernel_size
    N, C, H, W = x.shape
    OH = _pool_out_size(H, kernel_size, stride)
    OW = _pool_out_size(W, kernel_size, stride)
    rows = []
    for i in range(OH):
        cols = []
        for j in range(OW):
            h0, w0 = i * stride, j * stride
            h1, w1 = min(h0 + kernel_size, H), min(w0 + kernel_size, W)
            cols.append(jnp.max(x[:, :, h0:h1, w0:w1], axis=(2, 3)))
        rows.append(jnp.stack(cols, axis=-1))
    return jnp.stack(rows, axis=-2)


if __name__ == "__main__":
    key = jax.random.PRNGKey(0)

    # 1) The module's literal use: input reshaped to (-1, 1, 5, 5).
    flat = jax.random.normal(key, (2 * 25,), dtype=jnp.float32)
    x = flat.reshape(-1, 1, 5, 5)                   # (2, 1, 5, 5)
    out = jax.block_until_ready(maxpool2d_ceil(x, kernel_size=3))
    ref = _reference_maxpool2d_ceil(x, kernel_size=3)
    assert out.shape == (2, 1, 2, 2), out.shape
    assert jnp.allclose(out, ref), "mismatch vs reference (small case)"

    # 2) Multi-block "parallel" grid, evenly divisible tiles (B = 4096 -> 2 blocks).
    xb = jax.random.normal(jax.random.PRNGKey(1), (4096, 1, 5, 5), dtype=jnp.float32)
    outb = jax.block_until_ready(maxpool2d_ceil(xb, kernel_size=3))
    assert jnp.allclose(outb, _reference_maxpool2d_ceil(xb)), "mismatch (divisible tiled case)"

    # 3) Partial boundary block (B = 1000, TB = 504 -> last block masked).
    xc = jax.random.normal(jax.random.PRNGKey(2), (250, 4, 5, 5), dtype=jnp.float32)
    outc = jax.block_until_ready(maxpool2d_ceil(xc, kernel_size=3))
    assert jnp.allclose(outc, _reference_maxpool2d_ceil(xc)), "mismatch (boundary tiled case)"

    # 4) Non-square spatial with a clipped last row window, single block.
    xd = jax.random.normal(jax.random.PRNGKey(3), (4, 3, 7, 6), dtype=jnp.float32)
    outd = jax.block_until_ready(maxpool2d_ceil(xd, kernel_size=3))
    assert outd.shape == (4, 3, 3, 2), outd.shape
    assert jnp.allclose(outd, _reference_maxpool2d_ceil(xd)), "mismatch (non-square case)"

    print("KERNEL_OK")
</pallas_src>

<mosaic_0001>
module attributes {stable_mosaic.version = 11 : i64} {
  func.func @kernel(%arg0: i32, %arg1: memref<2x25xf32, #tpu.memory_space<vmem>>, %arg2: memref<2x4xf32, #tpu.memory_space<vmem>>) attributes {dimension_semantics = [#tpu.dimension_semantics<parallel>], iteration_bounds = array<i64: 1>, scalar_prefetch = 0 : i64, scratch_operands = 0 : i64, tpu.core_type = #tpu.core_type<tc>, window_params = [{transform_indices = @transform_0, window_bounds = array<i64: 2, 25>}, {transform_indices = @transform_1, window_bounds = array<i64: 2, 4>}]} {
    %c0 = arith.constant 0 : index
    %c0_0 = arith.constant 0 : index
    %0 = vector.load %arg1[%c0, %c0_0] : memref<2x25xf32, #tpu.memory_space<vmem>>, vector<2x25xf32>
    %1 = vector.extract_strided_slice %0 {offsets = [0, 0], sizes = [2, 1], strides = [1, 1]} : vector<2x25xf32> to vector<2x1xf32>
    %2 = vector.extract_strided_slice %0 {offsets = [0, 1], sizes = [2, 1], strides = [1, 1]} : vector<2x25xf32> to vector<2x1xf32>
    %3 = vector.extract_strided_slice %0 {offsets = [0, 2], sizes = [2, 1], strides = [1, 1]} : vector<2x25xf32> to vector<2x1xf32>
    %4 = vector.extract_strided_slice %0 {offsets = [0, 5], sizes = [2, 1], strides = [1, 1]} : vector<2x25xf32> to vector<2x1xf32>
    %5 = vector.extract_strided_slice %0 {offsets = [0, 6], sizes = [2, 1], strides = [1, 1]} : vector<2x25xf32> to vector<2x1xf32>
    %6 = vector.extract_strided_slice %0 {offsets = [0, 7], sizes = [2, 1], strides = [1, 1]} : vector<2x25xf32> to vector<2x1xf32>
    %7 = vector.extract_strided_slice %0 {offsets = [0, 10], sizes = [2, 1], strides = [1, 1]} : vector<2x25xf32> to vector<2x1xf32>
    %8 = vector.extract_strided_slice %0 {offsets = [0, 11], sizes = [2, 1], strides = [1, 1]} : vector<2x25xf32> to vector<2x1xf32>
    %9 = vector.extract_strided_slice %0 {offsets = [0, 12], sizes = [2, 1], strides = [1, 1]} : vector<2x25xf32> to vector<2x1xf32>
    %10 = arith.maximumf %1, %2 : vector<2x1xf32>
    %11 = arith.maximumf %3, %4 : vector<2x1xf32>
    %12 = arith.maximumf %5, %6 : vector<2x1xf32>
    %13 = arith.maximumf %7, %8 : vector<2x1xf32>
    %14 = arith.maximumf %10, %11 : vector<2x1xf32>
    %15 = arith.maximumf %12, %13 : vector<2x1xf32>
    %16 = arith.maximumf %14, %15 : vector<2x1xf32>
    %17 = arith.maximumf %16, %9 : vector<2x1xf32>
    %18 = vector.extract_strided_slice %0 {offsets = [0, 3], sizes = [2, 1], strides = [1, 1]} : vector<2x25xf32> to vector<2x1xf32>
    %19 = vector.extract_strided_slice %0 {offsets = [0, 4], sizes = [2, 1], strides = [1, 1]} : vector<2x25xf32> to vector<2x1xf32>
    %20 = vector.extract_strided_slice %0 {offsets = [0, 8], sizes = [2, 1], strides = [1, 1]} : vector<2x25xf32> to vector<2x1xf32>
    %21 = vector.extract_strided_slice %0 {offsets = [0, 9], sizes = [2, 1], strides = [1, 1]} : vector<2x25xf32> to vector<2x1xf32>
    %22 = vector.extract_strided_slice %0 {offsets = [0, 13], sizes = [2, 1], strides = [1, 1]} : vector<2x25xf32> to vector<2x1xf32>
    %23 = vector.extract_strided_slice %0 {offsets = [0, 14], sizes = [2, 1], strides = [1, 1]} : vector<2x25xf32> to vector<2x1xf32>
    %24 = arith.maximumf %18, %19 : vector<2x1xf32>
    %25 = arith.maximumf %20, %21 : vector<2x1xf32>
    %26 = arith.maximumf %22, %23 : vector<2x1xf32>
    %27 = arith.maximumf %24, %25 : vector<2x1xf32>
    %28 = arith.maximumf %27, %26 : vector<2x1xf32>
    %29 = vector.extract_strided_slice %0 {offsets = [0, 15], sizes = [2, 1], strides = [1, 1]} : vector<2x25xf32> to vector<2x1xf32>
    %30 = vector.extract_strided_slice %0 {offsets = [0, 16], sizes = [2, 1], strides = [1, 1]} : vector<2x25xf32> to vector<2x1xf32>
    %31 = vector.extract_strided_slice %0 {offsets = [0, 17], sizes = [2, 1], strides = [1, 1]} : vector<2x25xf32> to vector<2x1xf32>
    %32 = vector.extract_strided_slice %0 {offsets = [0, 20], sizes = [2, 1], strides = [1, 1]} : vector<2x25xf32> to vector<2x1xf32>
    %33 = vector.extract_strided_slice %0 {offsets = [0, 21], sizes = [2, 1], strides = [1, 1]} : vector<2x25xf32> to vector<2x1xf32>
    %34 = vector.extract_strided_slice %0 {offsets = [0, 22], sizes = [2, 1], strides = [1, 1]} : vector<2x25xf32> to vector<2x1xf32>
    %35 = arith.maximumf %29, %30 : vector<2x1xf32>
    %36 = arith.maximumf %31, %32 : vector<2x1xf32>
    %37 = arith.maximumf %33, %34 : vector<2x1xf32>
    %38 = arith.maximumf %35, %36 : vector<2x1xf32>
    %39 = arith.maximumf %38, %37 : vector<2x1xf32>
    %40 = vector.extract_strided_slice %0 {offsets = [0, 18], sizes = [2, 1], strides = [1, 1]} : vector<2x25xf32> to vector<2x1xf32>
    %41 = vector.extract_strided_slice %0 {offsets = [0, 19], sizes = [2, 1], strides = [1, 1]} : vector<2x25xf32> to vector<2x1xf32>
    %42 = vector.extract_strided_slice %0 {offsets = [0, 23], sizes = [2, 1], strides = [1, 1]} : vector<2x25xf32> to vector<2x1xf32>
    %43 = vector.extract_strided_slice %0 {offsets = [0, 24], sizes = [2, 1], strides = [1, 1]} : vector<2x25xf32> to vector<2x1xf32>
    %44 = arith.maximumf %40, %41 : vector<2x1xf32>
    %45 = arith.maximumf %42, %43 : vector<2x1xf32>
    %46 = arith.maximumf %44, %45 : vector<2x1xf32>
    %47 = tpu.concatenate %17, %28, %39, %46 in 1 : vector<2x1xf32>, vector<2x1xf32>, vector<2x1xf32>, vector<2x1xf32> -> vector<2x4xf32>
    %c0_1 = arith.constant 0 : index
    %c0_2 = arith.constant 0 : index
    %48 = vector.load %arg2[%c0_1, %c0_2] : memref<2x4xf32, #tpu.memory_space<vmem>>, vector<2x4xf32>
    tpu.vector_store %arg2[%c0_1, %c0_2], %47 {strides = array<i32>} : memref<2x4xf32, #tpu.memory_space<vmem>>, vector<2x4xf32>,
    return
  }
  func.func @transform_0(%arg0: i32) -> (i32, i32) {
    %c0_i32 = arith.constant 0 : i32
    %c0_i32_0 = arith.constant 0 : i32
    return %arg0, %c0_i32 : i32, i32
  }
  func.func @transform_1(%arg0: i32) -> (i32, i32) {
    %c0_i32 = arith.constant 0 : i32
    %c0_i32_0 = arith.constant 0 : i32
    return %arg0, %c0_i32 : i32, i32
  }
}

</mosaic_0001>

<llo_original>
// kernel: tpu_custom_call.1
$region0: #{tpu_custom_call.1}
  #allocation0 [shape = 'u32[]', space=smem, size = 0x4, offset = 0x4, fixed_abs, tag = 'smem constant byte address 0x4 - core index']
  #allocation1 [shape = 'u32[144,128]{1,0:T(1,128)}', space=vmem, size = 0x12000, scoped, tag = 'internal scratch']
  %s0 = inlined_call_operand.hbm [shape: f32[2,25], index: 0, kind: input, shape index: {}]
  %s1 = inlined_call_operand.hbm [shape: f32[2,4], index: 1, kind: output, shape index: {}]
  %s2 = sld [smem:[#allocation0]]
  $region18: #{tpu_custom_call.1} parent=0
    _
  %s4 = ssub.s32 1, %s2
  %s5 = scalar_select 0, %s4, %s2
  $region1: #{tpu_custom_call.1} parent=0
    #allocation2 [shape = 'u8[1024]{0}', space=vmem, size = 0x400, scoped, tag = 'input window, operand 0, single buffered']
    #allocation3 [shape = 's32[1]{0}', space=sflag, size = 0x4, scoped, tag = 'scoped memory for tpu_custom_call.1']
    #allocation4 [shape = 's32[1]{0}', space=sflag, size = 0x4, scoped, tag = 'scoped memory for tpu_custom_call.1']
    #allocation5 [shape = 'u8[1024]{0}', space=vmem, size = 0x400, scoped, tag = 'output window, operand 0, single buffered']
    %6 = vsyncpa [#allocation3], 0
    %7 = vsyncpa [#allocation4], 0
    // Predicated region
    $region2: #{tpu_custom_call.1} parent=1 // pred_check
      _
    $region3: #{tpu_custom_call.1} parent=1 // pred_check_branch
      %9 = sbr.rel (0) target = $region5
    $region4: #{tpu_custom_call.1} parent=1 // pred_region
      %s11 = ssub.s32 32, 32
      %12 = vsyncadd [#allocation3], %s11
      %s14 = sshll.u32 [#allocation2], 4
      %s15 = int_to_ptr.vmem [resolvable:$true] %s14
      %17 = dma.hbm_to_vmem [thread:$0]  %s0, 32, %s15, [#allocation3]
    $region5: #{tpu_custom_call.1} parent=1 // pred_fallthru
      _
    // Predicated region
    $region6: #{tpu_custom_call.1} parent=1 // pred_check
      _
    $region7: #{tpu_custom_call.1} parent=1 // pred_check_branch
      %19 = sbr.rel (0) target = $region9
    $region8: #{tpu_custom_call.1} parent=1 // pred_region
      %20 = dma.done [#allocation3], 32
    $region9: #{tpu_custom_call.1} parent=1 // pred_fallthru
      _
    %v21 = vld [vmem:[#allocation2] sm:$0x3]
    %23 = vrot.lane.b32.xlu0 %v21, 127
    %v24 = vpop.permute.xlu0 %23
    %v26 = vmax.f32 %v21, %v24
    %27 = vrot.lane.b32.xlu0 %v21, 125
    %v28 = vpop.permute.xlu0 %27
    %v30 = vmax.f32 %v21, %v28
    %32 = vrot.lane.b32.xlu0 %v30, 126
    %v33 = vpop.permute.xlu0 %32
    %v35 = vmax.f32 %v26, %v33
    %37 = vrot.lane.b32.xlu0 %v26, 124
    %v38 = vpop.permute.xlu0 %37
    %v40 = vmax.f32 %v26, %v38
    %42 = vrot.lane.b32.xlu0 %v40, 122
    %v43 = vpop.permute.xlu0 %42
    %v45 = vmax.f32 %v35, %v43
    %46 = vrot.lane.b32.xlu0 %v21, 116
    %v47 = vpop.permute.xlu0 %46
    %v49 = vmax.f32 %v45, %v47
    %50 = vrot.lane.b32.xlu0 %v26, 123
    %v51 = vpop.permute.xlu0 %50
    %v53 = vmax.f32 %v26, %v51
    %54 = vrot.lane.b32.xlu0 %v26, 118
    %v55 = vpop.permute.xlu0 %54
    %v57 = vmax.f32 %v53, %v55
    %58 = vrot.lane.b32.xlu0 %v26, 122
    %v59 = vpop.permute.xlu0 %58
    %v61 = vmax.f32 %v35, %v59
    %63 = vrot.lane.b32.xlu0 %v57, 126
    %v64 = vpop.permute.xlu0 %63
    %67 = vrot.lane.b32.xlu0 %v61, 115
    %v68 = vpop.permute.xlu0 %67
    %71 = vrot.lane.b32.xlu0 %v53, 113
    %v72 = vpop.permute.xlu0 %71
    %vm74 = vcmask 7168
    %v75 = vsel %vm74, %v49, %v64
    %vm76 = vcmask 15360
    %v77 = vsel %vm76, %v75, %v68
    %vm78 = vcmask 23552
    %v79 = vsel %vm78, %v77, %v72
    %vm80 = vcmask 25600
    %81 = vst.msk [vmem:[#allocation5] sm:$0x3] %vm80, %v79
    // Predicated region
    $region10: #{tpu_custom_call.1} parent=1 // pred_check
      _
    $region11: #{tpu_custom_call.1} parent=1 // pred_check_branch
      %83 = sbr.rel (0) target = $region13
    $region12: #{tpu_custom_call.1} parent=1 // pred_region
      %s85 = ssub.s32 32, 32
      %86 = vsyncadd [#allocation4], %s85
      %s88 = sshll.u32 [#allocation5], 4
      %s89 = int_to_ptr.vmem [resolvable:$true] %s88
      %91 = dma.vmem_to_hbm [thread:$0]  %s89, 32, %s1, [#allocation4]
    $region13: #{tpu_custom_call.1} parent=1 // pred_fallthru
      _
    // Predicated region
    $region14: #{tpu_custom_call.1} parent=1 // pred_check
      _
    $region15: #{tpu_custom_call.1} parent=1 // pred_check_branch
      %93 = sbr.rel (0) target = $region17
    $region16: #{tpu_custom_call.1} parent=1 // pred_region
      %94 = dma.done [#allocation4], 32
    $region17: #{tpu_custom_call.1} parent=1 // pred_fallthru
      _
    %95 = vsyncpa [#allocation3], 1
    %96 = vsyncpa [#allocation4], 1

</llo_original>
